<compile_context>
chip_gen: v5e
topology: v5e:2x2
jax: 0.10.0
libtpu: 0.0.40
codegen_flags: <defaults>
</compile_context>

<pallas_src>
import jax
import jax.numpy as jnp
from jax import lax
from jax.experimental import pallas as pl
from jax.experimental.pallas import tpu as pltpu


def se_block_kernel(x_ref, wd_ref, bd_ref, wu_ref, bu_ref, o_ref):
    # x_ref / o_ref: (Bt, C, H*W) lane-dense block for Bt batch elements.
    x = x_ref[...]

    # Global average pool: lane-axis reduce with f32 accumulation (no explicit
    # full-size f32 copy of x).
    pooled = jnp.mean(x, axis=-1, dtype=jnp.float32)               # (Bt, C)

    # "down" 1x1 conv on the MXU: contract C. wd: (internal, C).
    hid = lax.dot_general(
        pooled, wd_ref[...].astype(jnp.float32),
        dimension_numbers=(((1,), (1,)), ((), ())),
        preferred_element_type=jnp.float32,
    ) + bd_ref[...].astype(jnp.float32)                            # (Bt, internal)
    hid = jnp.maximum(hid, 0.0)

    # "up" 1x1 conv on the MXU: contract internal. wu: (C, internal).
    gate = lax.dot_general(
        hid, wu_ref[...].astype(jnp.float32),
        dimension_numbers=(((1,), (1,)), ((), ())),
        preferred_element_type=jnp.float32,
    ) + bu_ref[...].astype(jnp.float32)                            # (Bt, C)
    gate = jax.nn.sigmoid(gate)                                    # EUP, cheap

    # Per-channel scale: cheap lane broadcast of a (Bt, C, 1) column.
    # Dominant elementwise pass stays in the input dtype.
    o_ref[...] = (x * gate.astype(x.dtype)[:, :, None]).astype(o_ref.dtype)


def _pick_batch_tile(n, c, hw, itemsize, target_bytes=2 << 20):
    """Largest batch tile whose input block stays <= ~target_bytes, preferring
    >= 2 grid steps so both v7x TensorCores can be used (no-op on v5e/v6e).
    ~2 MiB blocks keep double-buffered in+out (~8 MiB) well inside the 32 MiB
    default scoped VMEM limit while large enough to approach HBM roofline."""
    candidates = [bt for bt in range(1, n + 1)
                  if n % bt == 0 and bt * c * hw * itemsize <= target_bytes]
    if not candidates:
        return 1
    two_step = [bt for bt in candidates if n // bt >= 2]
    return max(two_step) if two_step else max(candidates)


def se_block(x, w_down, b_down, w_up, b_up, *, block_batch=None):
    N, C, H, W = x.shape
    # The PyTorch module pools with kernel_size = W; that is a global pool
    # only when H == W (always true for RepVGG usage).
    assert H == W, "SEBlock assumes square spatial dims (global average pool)"
    internal = w_down.shape[0]
    assert w_down.shape == (internal, C)
    assert w_up.shape == (C, internal)
    hw = H * W

    bt = block_batch or _pick_batch_tile(N, C, hw, x.dtype.itemsize)
    assert N % bt == 0, "block_batch must divide the batch size"

    # Biases as 2-D (1, K) rows for clean VMEM layout.
    b_down2 = b_down.reshape(1, internal)
    b_up2 = b_up.reshape(1, C)

    # Lane-dense layout: H*W on lanes, C on sublanes. Reshape is free (contiguous).
    x3 = x.reshape(N, C, hw)

    out3 = pl.pallas_call(
        se_block_kernel,
        out_shape=jax.ShapeDtypeStruct((N, C, hw), x.dtype),
        grid=(N // bt,),
        in_specs=[
            pl.BlockSpec((bt, C, hw), lambda b: (b, 0, 0)),
            # Full-extent constant blocks: fetched once, VMEM-resident across steps.
            pl.BlockSpec((internal, C), lambda b: (0, 0)),
            pl.BlockSpec((1, internal), lambda b: (0, 0)),
            pl.BlockSpec((C, internal), lambda b: (0, 0)),
            pl.BlockSpec((1, C), lambda b: (0, 0)),
        ],
        out_specs=pl.BlockSpec((bt, C, hw), lambda b: (b, 0, 0)),
        compiler_params=pltpu.CompilerParams(
            dimension_semantics=("parallel",),
        ),
    )(x3, w_down, b_down2, w_up, b_up2)

    return out3.reshape(N, C, H, W)


def se_block_ref(x, w_down, b_down, w_up, b_up):
    # Pure-JAX reference matching the PyTorch forward.
    pooled = jnp.mean(x.astype(jnp.float32), axis=(2, 3))            # (N, C)
    hid = jnp.maximum(pooled @ w_down.T + b_down, 0.0)               # (N, internal)
    gate = jax.nn.sigmoid(hid @ w_up.T + b_up)                       # (N, C)
    return (x.astype(jnp.float32) * gate[:, :, None, None]).astype(x.dtype)


if __name__ == "__main__":
    input_channels = 4
    internal_neurons = 2
    N, H, W = 2, 16, 16

    key = jax.random.PRNGKey(0)
    kx, kwd, kbd, kwu, kbu = jax.random.split(key, 5)

    x = jax.random.normal(kx, (N, input_channels, H, W), dtype=jnp.float32)

    # Conv2d 1x1 weights squeezed to 2-D: (out_channels, in_channels)
    w_down = jax.random.normal(kwd, (internal_neurons, input_channels), jnp.float32) * 0.5
    b_down = jax.random.normal(kbd, (internal_neurons,), jnp.float32) * 0.1
    w_up = jax.random.normal(kwu, (input_channels, internal_neurons), jnp.float32) * 0.5
    b_up = jax.random.normal(kbu, (input_channels,), jnp.float32) * 0.1

    out = se_block(x, w_down, b_down, w_up, b_up)
    out = jax.block_until_ready(out)

    ref = se_block_ref(x, w_down, b_down, w_up, b_up)
    assert out.shape == x.shape and out.dtype == x.dtype
    assert jnp.allclose(out, ref, atol=1e-5, rtol=1e-5), "mismatch vs reference"

    print("KERNEL_OK")
</pallas_src>

<mosaic_0001>
module attributes {stable_mosaic.version = 11 : i64} {
  func.func @se_block_kernel(%arg0: i32, %arg1: memref<1x4x256xf32, #tpu.memory_space<vmem>>, %arg2: memref<2x4xf32, #tpu.memory_space<vmem>>, %arg3: memref<1x2xf32, #tpu.memory_space<vmem>>, %arg4: memref<4x2xf32, #tpu.memory_space<vmem>>, %arg5: memref<1x4xf32, #tpu.memory_space<vmem>>, %arg6: memref<1x4x256xf32, #tpu.memory_space<vmem>>) attributes {dimension_semantics = [#tpu.dimension_semantics<parallel>], iteration_bounds = array<i64: 2>, scalar_prefetch = 0 : i64, scratch_operands = 0 : i64, tpu.core_type = #tpu.core_type<tc>, window_params = [{transform_indices = @transform_0, window_bounds = array<i64: 1, 4, 256>}, {pipeline_mode = #tpu.pipeline_mode<synchronous>, transform_indices = @transform_1, window_bounds = array<i64: 2, 4>}, {pipeline_mode = #tpu.pipeline_mode<synchronous>, transform_indices = @transform_2, window_bounds = array<i64: 1, 2>}, {pipeline_mode = #tpu.pipeline_mode<synchronous>, transform_indices = @transform_3, window_bounds = array<i64: 4, 2>}, {pipeline_mode = #tpu.pipeline_mode<synchronous>, transform_indices = @transform_4, window_bounds = array<i64: 1, 4>}, {transform_indices = @transform_5, window_bounds = array<i64: 1, 4, 256>}]} {
    %c0 = arith.constant 0 : index
    %c0_0 = arith.constant 0 : index
    %c0_1 = arith.constant 0 : index
    %0 = vector.load %arg1[%c0, %c0_0, %c0_1] : memref<1x4x256xf32, #tpu.memory_space<vmem>>, vector<1x4x256xf32>
    %cst = arith.constant dense<0.000000e+00> : vector<1x4xf32>
    %1 = vector.multi_reduction <add>, %0, %cst [2] : vector<1x4x256xf32> to vector<1x4xf32>
    %cst_2 = arith.constant 2.560000e+02 : f32
    %2 = vector.broadcast %cst_2 : f32 to vector<1x4xf32>
    %3 = arith.divf %1, %2 : vector<1x4xf32>
    %c0_3 = arith.constant 0 : index
    %c0_4 = arith.constant 0 : index
    %4 = vector.load %arg2[%c0_3, %c0_4] : memref<2x4xf32, #tpu.memory_space<vmem>>, vector<2x4xf32>
    %cst_5 = arith.constant dense<0.000000e+00> : vector<1x2xf32>
    %5 = tpu.matmul %3, %4, %cst_5 {dimension_numbers = #tpu.dot_dimension_numbers<[1], [1], [0], [0], [0, 0, 1, 0], [], []>} : vector<1x4xf32>, vector<2x4xf32>, vector<1x2xf32> -> vector<1x2xf32>
    %c0_6 = arith.constant 0 : index
    %c0_7 = arith.constant 0 : index
    %6 = vector.load %arg3[%c0_6, %c0_7] : memref<1x2xf32, #tpu.memory_space<vmem>>, vector<1x2xf32>
    %7 = arith.addf %5, %6 : vector<1x2xf32>
    %cst_8 = arith.constant 0.000000e+00 : f32
    %8 = vector.broadcast %cst_8 : f32 to vector<1x2xf32>
    %9 = arith.maximumf %7, %8 : vector<1x2xf32>
    %c0_9 = arith.constant 0 : index
    %c0_10 = arith.constant 0 : index
    %10 = vector.load %arg4[%c0_9, %c0_10] : memref<4x2xf32, #tpu.memory_space<vmem>>, vector<4x2xf32>
    %cst_11 = arith.constant dense<0.000000e+00> : vector<1x4xf32>
    %11 = tpu.matmul %9, %10, %cst_11 {dimension_numbers = #tpu.dot_dimension_numbers<[1], [1], [0], [0], [0, 0, 1, 0], [], []>} : vector<1x2xf32>, vector<4x2xf32>, vector<1x4xf32> -> vector<1x4xf32>
    %c0_12 = arith.constant 0 : index
    %c0_13 = arith.constant 0 : index
    %12 = vector.load %arg5[%c0_12, %c0_13] : memref<1x4xf32, #tpu.memory_space<vmem>>, vector<1x4xf32>
    %13 = arith.addf %11, %12 : vector<1x4xf32>
    %14 = arith.negf %13 : vector<1x4xf32>
    %15 = math.exp %14 : vector<1x4xf32>
    %cst_14 = arith.constant 1.000000e+00 : f32
    %16 = vector.broadcast %cst_14 : f32 to vector<1x4xf32>
    %17 = arith.addf %16, %15 : vector<1x4xf32>
    %18 = arith.divf %16, %17 : vector<1x4xf32>
    %19 = vector.shape_cast %18 : vector<1x4xf32> to vector<1x4x1xf32>
    %20 = vector.broadcast %19 : vector<1x4x1xf32> to vector<1x4x256xf32>
    %21 = arith.mulf %0, %20 : vector<1x4x256xf32>
    %c0_15 = arith.constant 0 : index
    %c0_16 = arith.constant 0 : index
    %c0_17 = arith.constant 0 : index
    %22 = vector.load %arg6[%c0_15, %c0_16, %c0_17] : memref<1x4x256xf32, #tpu.memory_space<vmem>>, vector<1x4x256xf32>
    tpu.vector_store %arg6[%c0_15, %c0_16, %c0_17], %21 {strides = array<i32>} : memref<1x4x256xf32, #tpu.memory_space<vmem>>, vector<1x4x256xf32>,
    return
  }
  func.func @transform_0(%arg0: i32) -> (i32, i32, i32) {
    %c0_i32 = arith.constant 0 : i32
    %c0_i32_0 = arith.constant 0 : i32
    %c0_i32_1 = arith.constant 0 : i32
    return %arg0, %c0_i32, %c0_i32_0 : i32, i32, i32
  }
  func.func @transform_1(%arg0: i32) -> (i32, i32) {
    %c0_i32 = arith.constant 0 : i32
    %c0_i32_0 = arith.constant 0 : i32
    %c0_i32_1 = arith.constant 0 : i32
    return %c0_i32, %c0_i32_0 : i32, i32
  }
  func.func @transform_2(%arg0: i32) -> (i32, i32) {
    %c0_i32 = arith.constant 0 : i32
    %c0_i32_0 = arith.constant 0 : i32
    %c0_i32_1 = arith.constant 0 : i32
    return %c0_i32, %c0_i32_0 : i32, i32
  }
  func.func @transform_3(%arg0: i32) -> (i32, i32) {
    %c0_i32 = arith.constant 0 : i32
    %c0_i32_0 = arith.constant 0 : i32
    %c0_i32_1 = arith.constant 0 : i32
    return %c0_i32, %c0_i32_0 : i32, i32
  }
  func.func @transform_4(%arg0: i32) -> (i32, i32) {
    %c0_i32 = arith.constant 0 : i32
    %c0_i32_0 = arith.constant 0 : i32
    %c0_i32_1 = arith.constant 0 : i32
    return %c0_i32, %c0_i32_0 : i32, i32
  }
  func.func @transform_5(%arg0: i32) -> (i32, i32, i32) {
    %c0_i32 = arith.constant 0 : i32
    %c0_i32_0 = arith.constant 0 : i32
    %c0_i32_1 = arith.constant 0 : i32
    return %arg0, %c0_i32, %c0_i32_0 : i32, i32, i32
  }
}

</mosaic_0001>

<llo_original>
// kernel: tpu_custom_call.1
$region0: #{tpu_custom_call.1}
  #allocation0 [shape = 'u32[]', space=smem, size = 0x4, offset = 0x4, fixed_abs, tag = 'smem constant byte address 0x4 - core index']
  #allocation1 [shape = 'u32[72,128]{1,0:T(1,128)}', space=vmem, size = 0x9000, scoped, tag = 'internal scratch']
  %s0 = inlined_call_operand.hbm [shape: f32[2,4,256], index: 0, kind: input, shape index: {}]
  %s1 = inlined_call_operand.vmem [shape: f32[2,4], index: 1, kind: input, shape index: {}]
  %s2 = inlined_call_operand.vmem [shape: f32[1,2], index: 2, kind: input, shape index: {}]
  %s3 = inlined_call_operand.vmem [shape: f32[4,2], index: 3, kind: input, shape index: {}]
  %s4 = inlined_call_operand.vmem [shape: f32[1,4], index: 4, kind: input, shape index: {}]
  %s5 = inlined_call_operand.hbm [shape: f32[2,4,256], index: 5, kind: output, shape index: {}]
  %s6 = sld [smem:[#allocation0]]
  $region57: #{tpu_custom_call.1} parent=0
    _
  %s8 = ssub.s32 1, %s6
  %s9 = scalar_select 0, %s8, %s6
  $region1: #{tpu_custom_call.1} parent=0
    #allocation2 [shape = 'u8[8192]{0}', space=vmem, size = 0x2000, scoped, tag = 'input window, operand 0']
    #allocation3 [shape = 's32[2]{0}', space=sflag, size = 0x8, scoped, tag = 'scoped memory for tpu_custom_call.1']
    #allocation4 [shape = 's32[2]{0}', space=sflag, size = 0x8, scoped, tag = 'scoped memory for tpu_custom_call.1']
    #allocation5 [shape = 'u8[8192]{0}', space=vmem, size = 0x2000, scoped, tag = 'output window, operand 0']
    %10 = vsyncpa [#allocation3], 0
    %s11 = scalar_lea.sflag [#allocation3], 1
    %12 = vsyncpa %s11, 0
    %13 = vsyncpa [#allocation4], 0
    %s14 = scalar_lea.sflag [#allocation4], 1
    %15 = vsyncpa %s14, 0
    loop: start=0, step=1, limit=4
    $region2: #{tpu_custom_call.1} parent=1 // loop_pre_header
      _
    $region3: #{tpu_custom_call.1} parent=1 // loop_header
      %s17 = sphi 0, %s21
      %p18 = scmp.ge.s32.totalorder %s17, 4
      %s27 = sphi 0, %s29
      %s30 = sphi 0, %s27
      %s31 = sphi 0, %s30
      %s47 = sphi 0, %s31
      %s51 = sphi 0, %s51
      %s53 = sphi 0, %s51
      %s54 = sphi 0, %s53
      %s68 = sphi 0, %s54
      %s72 = sphi 0, %s72
      %s74 = sphi 0, %s72
      %s75 = sphi 0, %s74
      %s89 = sphi 0, %s75
      %s93 = sphi 0, %s93
      %s95 = sphi 0, %s93
      %s96 = sphi 0, %s95
      %s110 = sphi 0, %s96
      %s114 = sphi 0, %s114
      %s116 = sphi 0, %s114
      %s117 = sphi 0, %s116
      %s131 = sphi 0, %s117
      %s137 = sphi 0, %s139
      %s140 = sphi 0, %s137
      %s141 = sphi 0, %s140
      %s157 = sphi 0, %s141
    $region4: #{tpu_custom_call.1} parent=1 // loop_header_branch
      %20 = sbr.rel (%p18) target = $region8
    $region5: #{tpu_custom_call.1} parent=1 // loop_body
      %s22 = ssub.s32 %s17, 1
      %s23 = ssub.s32 %s17, 2
      %s24 = sadd.s32 %s17, 1
      %s25 = ssub.s32 %s17, %s24
      %p26 = scmp.eq.s32.totalorder %s25, 0
      %s28 = sadd.s32 %s27, 1
      %s29 = scalar_select %p26, %s27, %s28
      %p32 = pneg %p26
      %p33 = scmp.eq.s32.totalorder %s17, 1
      %p34 = por %p32, %p33
      %p35 = scmp.ne.s32.totalorder %s27, %s30
      %p36 = scmp.eq.s32.totalorder %s17, 0
      %p37 = por %p35, %p36
      %p38 = scmp.ne.s32.totalorder %s27, %s30
      %p39 = scmp.eq.s32.totalorder %s22, 1
      %p40 = por %p38, %p39
      %p41 = scmp.ne.s32.totalorder %s30, %s31
      %p42 = scmp.eq.s32.totalorder %s22, 0
      %p43 = por %p41, %p42
      %p44 = scmp.ne.s32.totalorder %s30, %s31
      %p45 = scmp.eq.s32.totalorder %s23, 1
      %p46 = por %p44, %p45
      %p48 = scmp.ne.s32.totalorder %s31, %s47
      %p49 = scmp.eq.s32.totalorder %s23, 0
      %p50 = por %p48, %p49
      %s52 = sadd.s32 %s51, 1
      %p55 = scmp.eq.s32.totalorder %s17, 1
      %p56 = scmp.ne.s32.totalorder %s51, %s53
      %p57 = scmp.eq.s32.totalorder %s17, 0
      %p58 = por %p56, %p57
      %p59 = scmp.ne.s32.totalorder %s51, %s53
      %p60 = scmp.eq.s32.totalorder %s22, 1
      %p61 = por %p59, %p60
      %p62 = scmp.ne.s32.totalorder %s53, %s54
      %p63 = scmp.eq.s32.totalorder %s22, 0
      %p64 = por %p62, %p63
      %p65 = scmp.ne.s32.totalorder %s53, %s54
      %p66 = scmp.eq.s32.totalorder %s23, 1
      %p67 = por %p65, %p66
      %p69 = scmp.ne.s32.totalorder %s54, %s68
      %p70 = scmp.eq.s32.totalorder %s23, 0
      %p71 = por %p69, %p70
      %s73 = sadd.s32 %s72, 1
      %p76 = scmp.eq.s32.totalorder %s17, 1
      %p77 = scmp.ne.s32.totalorder %s72, %s74
      %p78 = scmp.eq.s32.totalorder %s17, 0
      %p79 = por %p77, %p78
      %p80 = scmp.ne.s32.totalorder %s72, %s74
      %p81 = scmp.eq.s32.totalorder %s22, 1
      %p82 = por %p80, %p81
      %p83 = scmp.ne.s32.totalorder %s74, %s75
      %p84 = scmp.eq.s32.totalorder %s22, 0
      %p85 = por %p83, %p84
      %p86 = scmp.ne.s32.totalorder %s74, %s75
      %p87 = scmp.eq.s32.totalorder %s23, 1
      %p88 = por %p86, %p87
      %p90 = scmp.ne.s32.totalorder %s75, %s89
      %p91 = scmp.eq.s32.totalorder %s23, 0
      %p92 = por %p90, %p91
      %s94 = sadd.s32 %s93, 1
      %p97 = scmp.eq.s32.totalorder %s17, 1
      %p98 = scmp.ne.s32.totalorder %s93, %s95
      %p99 = scmp.eq.s32.totalorder %s17, 0
      %p100 = por %p98, %p99
      %p101 = scmp.ne.s32.totalorder %s93, %s95
      %p102 = scmp.eq.s32.totalorder %s22, 1
      %p103 = por %p101, %p102
      %p104 = scmp.ne.s32.totalorder %s95, %s96
      %p105 = scmp.eq.s32.totalorder %s22, 0
      %p106 = por %p104, %p105
      %p107 = scmp.ne.s32.totalorder %s95, %s96
      %p108 = scmp.eq.s32.totalorder %s23, 1
      %p109 = por %p107, %p108
      %p111 = scmp.ne.s32.totalorder %s96, %s110
      %p112 = scmp.eq.s32.totalorder %s23, 0
      %p113 = por %p111, %p112
      %s115 = sadd.s32 %s114, 1
      %p118 = scmp.eq.s32.totalorder %s17, 1
      %p119 = scmp.ne.s32.totalorder %s114, %s116
      %p120 = scmp.eq.s32.totalorder %s17, 0
      %p121 = por %p119, %p120
      %p122 = scmp.ne.s32.totalorder %s114, %s116
      %p123 = scmp.eq.s32.totalorder %s22, 1
      %p124 = por %p122, %p123
      %p125 = scmp.ne.s32.totalorder %s116, %s117
      %p126 = scmp.eq.s32.totalorder %s22, 0
      %p127 = por %p125, %p126
      %p128 = scmp.ne.s32.totalorder %s116, %s117
      %p129 = scmp.eq.s32.totalorder %s23, 1
      %p130 = por %p128, %p129
      %p132 = scmp.ne.s32.totalorder %s117, %s131
      %p133 = scmp.eq.s32.totalorder %s23, 0
      %p134 = por %p132, %p133
      %s135 = ssub.s32 %s17, %s24
      %p136 = scmp.eq.s32.totalorder %s135, 0
      %s138 = sadd.s32 %s137, 1
      %s139 = scalar_select %p136, %s137, %s138
      %p142 = pneg %p136
      %p143 = scmp.eq.s32.totalorder %s17, 1
      %p144 = por %p142, %p143
      %p145 = scmp.ne.s32.totalorder %s137, %s140
      %p146 = scmp.eq.s32.totalorder %s17, 0
      %p147 = por %p145, %p146
      %p148 = scmp.ne.s32.totalorder %s137, %s140
      %p149 = scmp.eq.s32.totalorder %s22, 1
      %p150 = por %p148, %p149
      %p151 = scmp.ne.s32.totalorder %s140, %s141
      %p152 = scmp.eq.s32.totalorder %s22, 0
      %p153 = por %p151, %p152
      %p154 = scmp.ne.s32.totalorder %s140, %s141
      %p155 = scmp.eq.s32.totalorder %s23, 1
      %p156 = por %p154, %p155
      %p158 = scmp.ne.s32.totalorder %s141, %s157
      %p159 = scmp.eq.s32.totalorder %s23, 0
      %p160 = por %p158, %p159
      %p161 = scmp.le.s32.totalorder 1, %s17
      %p162 = scmp.lt.s32.totalorder %s17, 3
      %p163 = pnand %p161, %p162
      %p164 = pneg %p163
      // Predicated region
      $region9: #{tpu_custom_call.1} parent=5 // pred_check
        _
      $region10: #{tpu_custom_call.1} parent=5 // pred_check_branch
        %166 = sbr.rel (%p163) target = $region12
      $region11: #{tpu_custom_call.1} parent=5 // pred_region
        %s167 = ssub.s32 %s17, 1
        // Predicated region
        $region13: #{tpu_custom_call.1} parent=11 // pred_check
          %p168 = pneg %p64
        $region14: #{tpu_custom_call.1} parent=11 // pred_check_branch
          %170 = sbr.rel (%p168) target = $region16
        $region15: #{tpu_custom_call.1} parent=11 // pred_region
          _
        $region16: #{tpu_custom_call.1} parent=11 // pred_fallthru
          _
        // Predicated region
        $region17: #{tpu_custom_call.1} parent=11 // pred_check
          %p171 = pneg %p85
        $region18: #{tpu_custom_call.1} parent=11 // pred_check_branch
          %173 = sbr.rel (%p171) target = $region20
        $region19: #{tpu_custom_call.1} parent=11 // pred_region
          _
        $region20: #{tpu_custom_call.1} parent=11 // pred_fallthru
          _
        // Predicated region
        $region21: #{tpu_custom_call.1} parent=11 // pred_check
          %p174 = pneg %p106
        $region22: #{tpu_custom_call.1} parent=11 // pred_check_branch
          %176 = sbr.rel (%p174) target = $region24
        $region23: #{tpu_custom_call.1} parent=11 // pred_region
          _
        $region24: #{tpu_custom_call.1} parent=11 // pred_fallthru
          _
        // Predicated region
        $region25: #{tpu_custom_call.1} parent=11 // pred_check
          %p177 = pneg %p127
        $region26: #{tpu_custom_call.1} parent=11 // pred_check_branch
          %179 = sbr.rel (%p177) target = $region28
        $region27: #{tpu_custom_call.1} parent=11 // pred_region
          _
        $region28: #{tpu_custom_call.1} parent=11 // pred_fallthru
          _
      $region12: #{tpu_custom_call.1} parent=5 // pred_fallthru
        _
      %p180 = scmp.lt.s32.totalorder %s17, 2
      // Predicated region
      $region29: #{tpu_custom_call.1} parent=5 // pred_check
        %p181 = pneg %p180
      $region30: #{tpu_custom_call.1} parent=5 // pred_check_branch
        %183 = sbr.rel (%p181) target = $region32
      $region31: #{tpu_custom_call.1} parent=5 // pred_region
        // Predicated region
        $region33: #{tpu_custom_call.1} parent=31 // pred_check
          %p184 = pneg %p37
        $region34: #{tpu_custom_call.1} parent=31 // pred_check_branch
          %186 = sbr.rel (%p184) target = $region36
        $region35: #{tpu_custom_call.1} parent=31 // pred_region
          %s187 = sand.u32 %s27, 1
          %s188 = scalar_lea.sflag [#allocation3], %s187
          %s189 = sand.u32 %s27, 1
          %s190 = smul.addr %s189, 8
          %s191 = scalar_lea.vmem [#allocation2], %s190
          %193 = vsyncadd %s188, 0
          %s194 = smul.addr %s17, 2
          %s195 = smul.addr %s194, 4
          %s196 = scalar_lea.hbm %s0, %s195
          %s198 = sshll.u32 %s196, 4
          %s199 = int_to_ptr.hbm [resolvable:$true] %s198
          %s200 = sshll.u32 %s191, 4
          %s201 = int_to_ptr.vmem [resolvable:$true] %s200
          %203 = dma.hbm_to_vmem [thread:$0]  %s199, 128, %s201, %s188
        $region36: #{tpu_custom_call.1} parent=31 // pred_fallthru
          _
      $region32: #{tpu_custom_call.1} parent=5 // pred_fallthru
        _
      %p204 = scmp.le.s32.totalorder 1, %s17
      %p205 = scmp.lt.s32.totalorder %s17, 3
      %p206 = pnand %p204, %p205
      %p207 = pneg %p206
      // Predicated region
      $region37: #{tpu_custom_call.1} parent=5 // pred_check
        _
      $region38: #{tpu_custom_call.1} parent=5 // pred_check_branch
        %209 = sbr.rel (%p206) target = $region40
      $region39: #{tpu_custom_call.1} parent=5 // pred_region
        %s210 = ssub.s32 %s17, 1
        %s211 = sand.u32 %s30, 1
        %s212 = scalar_lea.sflag [#allocation3], %s211
        %s213 = sand.u32 %s30, 1
        %s214 = smul.addr %s213, 8
        %s215 = scalar_lea.vmem [#allocation2], %s214
        // Predicated region
        $region41: #{tpu_custom_call.1} parent=39 // pred_check
          %p216 = pneg %p43
        $region42: #{tpu_custom_call.1} parent=39 // pred_check_branch
          %218 = sbr.rel (%p216) target = $region44
        $region43: #{tpu_custom_call.1} parent=39 // pred_region
          %220 = dma.done %s212, 128
        $region44: #{tpu_custom_call.1} parent=39 // pred_fallthru
          _
        %s221 = sand.u32 %s30, 1
        %s222 = scalar_lea.sflag [#allocation3], %s221
        %s223 = sand.u32 %s30, 1
        %s224 = smul.addr %s223, 8
        %s225 = scalar_lea.vmem [#allocation2], %s224
        %p226 = pneg %p43
        %p227 = pneg %p40
        %p228 = pneg %p64
        %p229 = pneg %p61
        %p230 = pneg %p85
        %p231 = pneg %p82
        %p232 = pneg %p106
        %p233 = pneg %p103
        %p234 = pneg %p127
        %p235 = pneg %p124
        %p236 = pneg %p153
        %p237 = pneg %p150
        %s238 = sand.u32 %s140, 1
        %s239 = scalar_lea.sflag [#allocation4], %s238
        %s240 = sand.u32 %s140, 1
        %s241 = smul.addr %s240, 8
        %s242 = scalar_lea.vmem [#allocation5], %s241
        %v243 = vld [vmem:[%s215] sm:$0xff]
        %245 = vst [vmem:[#allocation1] ss:$2 sm:$0xff] %v243
        %v246 = vld.sshfl [vmem:[#allocation1] sm:$0xff pattern:$0x75316420]
        %v247 = vld.sshfl [vmem:[#allocation1 + $0x8] sm:$0xff pattern:$0x75316420]
        %vm250 = vcmask 1043456
        %v251 = vsel %vm250, %v246, 0.0
        %v252 = vsel %vm250, %v247, 0.0
        %v253 = vadd.f32 %v251, %v252
        %254 = vadd.xlane.f32.xlu0 %v253
        %v255 = vpop.xlane.xlu0 %254
        %v256 = vrcp.pop 256.0
        %v257 = vmul.f32 256.0, %v256
        %v258 = vsub.f32 1.0, %v257
        %v259 = vmul.f32 %v256, %v258
        %v260 = vadd.f32 %v256, %v259
        %vm261 = vweird.f32 %v256
        %v262 = vsel %vm261, %v256, %v260
        %v263 = vmul.f32 %v255, %v262
        %v264 = vld [vmem:[%s1] sm:$0x3]
        %v265 = vld [vmem:[%s2] sm:$0x1]
        %v267 = vlaneseq
        %v268 = vand.u32 %v267, 127
        %v269 = vperm.slane %v263, %v268
        %vm270 = vcmask 31744
        %v271 = vsel %vm270, %v269, 0
        %v274 = vsel %vm270, %v264, 0
        %276 = vmatpush.xpose.msra.mxu0 0.0
        %277 = vmatpush.xpose.msra.mxu0 0.0
        %278 = vmatpush.xpose.msra.mxu0 0.0
        %279 = vmatpush.xpose.msra.mxu0 0.0
        %280 = vmatpush.xpose.msra.mxu0 0.0
        %281 = vmatpush.xpose.msra.mxu0 0.0
        %282 = vmatpush.xpose.msra.mxu0 0.0
        %283 = vmatpush.xpose.msra.mxu0 0.0
        %284 = vmatpush.xpose.msra.mxu0 0.0
        %285 = vmatpush.xpose.msra.mxu0 0.0
        %286 = vmatpush.xpose.msra.mxu0 0.0
        %287 = vmatpush.xpose.msra.mxu0 0.0
        %288 = vmatpush.xpose.msra.mxu0 0.0
        %289 = vmatpush.xpose.msra.mxu0 0.0
        %290 = vmatpush.xpose.msra.mxu0 0.0
        %291 = vmatpush.xpose.msra.mxu0 %v274
        %292 = vmatmul.f32.gmra.mxu0 %v271
        %v293 = vpop.f32.mrf.mxu0
        %v294 = vadd.f32 %v265, %v293
        %295 = vdwg.mxu0
        %v296 = vmax.f32 %v294, 0.0
        %v297 = vld [vmem:[%s3] sm:$0xf]
        %v298 = vld [vmem:[%s4] sm:$0x1]
        %vm299 = vcmask 15360
        %v301 = vsel %vm299, %v296, 0
        %v304 = vsel %vm299, %v297, 0
        %306 = vmatpush.xpose.msra.mxu0 0.0
        %307 = vmatpush.xpose.msra.mxu0 0.0
        %308 = vmatpush.xpose.msra.mxu0 0.0
        %309 = vmatpush.xpose.msra.mxu0 0.0
        %310 = vmatpush.xpose.msra.mxu0 0.0
        %311 = vmatpush.xpose.msra.mxu0 0.0
        %312 = vmatpush.xpose.msra.mxu0 0.0
        %313 = vmatpush.xpose.msra.mxu0 0.0
        %314 = vmatpush.xpose.msra.mxu0 0.0
        %315 = vmatpush.xpose.msra.mxu0 0.0
        %316 = vmatpush.xpose.msra.mxu0 0.0
        %317 = vmatpush.xpose.msra.mxu0 0.0
        %318 = vmatpush.xpose.msra.mxu0 0.0
        %319 = vmatpush.xpose.msra.mxu0 0.0
        %320 = vmatpush.xpose.msra.mxu0 0.0
        %321 = vmatpush.xpose.msra.mxu0 %v304
        %322 = vmatmul.f32.gmra.mxu0 %v301
        %v323 = vpop.f32.mrf.mxu0
        %v324 = vadd.f32 %v298, %v323
        %325 = vdwg.mxu0
        %v326 = vxor.u32 %v324, 2147483648
        %v327 = vmul.f32 %v326, 1.442695
        %v328 = vpow.pop %v327
        %v329 = vadd.f32 %v328, 1.0
        %v330 = vrcp.pop %v329
        %v331 = vmul.f32 %v329, %v330
        %v332 = vsub.f32 1.0, %v331
        %v333 = vmul.f32 %v330, %v332
        %v334 = vadd.f32 %v330, %v333
        %vm335 = vweird.f32 %v329
        %vm336 = vweird.f32 %v330
        %vm337 = vmor %vm335, %vm336
        %v338 = vsel %vm337, %v330, %v334
        %v339 = vand.u32 2147483647, %v329
        %vm340 = vcmp.eq.f32.partialorder %v339, 8.507059e+37
        %v341 = vand.u32 %v329, 2147483648
        %v342 = vor.u32 1.1754944e-38, %v341
        %v343 = vsel %vm340, %v342, %v338
        %v344 = vmul.f32 1.0, %v343
        %v345 = vperm.slane %v344, 0
        %v346 = vlaneseq
        %v347 = vshrl.u32 %v346, 7
        %349 = vset.pattern.permute.xlu0 %v347
        %350 = vperm.xlu0 %349, %v345
        %v351 = vpop.permute.xlu0 %350
        %v354 = vunpack.c.l.s4 839922192
        %v355 = vunpack.c.0.s8 %v354
        %v356 = vperm.slane %v351, %v355
        %v358 = vmul.f32 %v243, %v356
        %359 = vst [vmem:[%s242] sm:$0xff] %v358
        %s360 = sand.u32 %s140, 1
        %s361 = scalar_lea.sflag [#allocation4], %s360
        %s362 = sand.u32 %s140, 1
        %s363 = smul.addr %s362, 8
        %s364 = scalar_lea.vmem [#allocation5], %s363
        // Predicated region
        $region45: #{tpu_custom_call.1} parent=39 // pred_check
          %p365 = pneg %p150
        $region46: #{tpu_custom_call.1} parent=39 // pred_check_branch
          %367 = sbr.rel (%p365) target = $region48
        $region47: #{tpu_custom_call.1} parent=39 // pred_region
          %369 = vsyncadd %s361, 0
          %s370 = smul.addr %s22, 2
          %s371 = smul.addr %s370, 4
          %s372 = scalar_lea.hbm %s5, %s371
          %s374 = sshll.u32 %s364, 4
          %s375 = int_to_ptr.vmem [resolvable:$true] %s374
          %s376 = sshll.u32 %s372, 4
          %s377 = int_to_ptr.hbm [resolvable:$true] %s376
          %379 = dma.vmem_to_hbm [thread:$0]  %s375, 128, %s377, %s361
        $region48: #{tpu_custom_call.1} parent=39 // pred_fallthru
          _
      $region40: #{tpu_custom_call.1} parent=5 // pred_fallthru
        _
      %p380 = scmp.le.s32.totalorder 2, %s17
      // Predicated region
      $region49: #{tpu_custom_call.1} parent=5 // pred_check
        %p381 = pneg %p380
      $region50: #{tpu_custom_call.1} parent=5 // pred_check_branch
        %383 = sbr.rel (%p381) target = $region52
      $region51: #{tpu_custom_call.1} parent=5 // pred_region
        %s384 = ssub.s32 %s17, 2
        // Predicated region
        $region53: #{tpu_custom_call.1} parent=51 // pred_check
          %p385 = pneg %p156
        $region54: #{tpu_custom_call.1} parent=51 // pred_check_branch
          %387 = sbr.rel (%p385) target = $region56
        $region55: #{tpu_custom_call.1} parent=51 // pred_region
          %s388 = sand.u32 %s141, 1
          %s389 = scalar_lea.sflag [#allocation4], %s388
          %s390 = sand.u32 %s141, 1
          %s391 = smul.addr %s390, 8
          %s392 = scalar_lea.vmem [#allocation5], %s391
          %394 = dma.done %s389, 128
        $region56: #{tpu_custom_call.1} parent=51 // pred_fallthru
          _
      $region52: #{tpu_custom_call.1} parent=5 // pred_fallthru
        _
    $region6: #{tpu_custom_call.1} parent=1 // loop_footer
      %s21 = sadd.s32 1, %s17
    $region7: #{tpu_custom_call.1} parent=1 // loop_footer_branch
      %16 = sbr.rel target = $region3
    $region8: #{tpu_custom_call.1} parent=1 // loop_exit
      _
    %395 = vsyncpa [#allocation3], 1
    %s396 = scalar_lea.sflag [#allocation3], 1
    %397 = vsyncpa %s396, 1
    %398 = vsyncpa [#allocation4], 1
    %s399 = scalar_lea.sflag [#allocation4], 1
    %400 = vsyncpa %s399, 1

</llo_original>
